<compile_context>
chip_gen: v7x
topology: tpu7x:2x2x1
jax: 0.10.0
libtpu: 0.0.40
codegen_flags: <defaults>
</compile_context>

<pallas_src>
import jax
import jax.numpy as jnp
from jax.experimental import pallas as pl
from jax.experimental.pallas import tpu as pltpu


def _uncertainty_weight_kernel(losses_ref, sigmas_ref, out_ref):
    # losses_ref: (1, N) f32 in VMEM
    # sigmas_ref: (1, N) f32 in VMEM
    # out_ref:    (1,)   f32 in SMEM (scalar result)
    losses = losses_ref[...]
    sigmas = sigmas_ref[...]
    sig2 = sigmas * sigmas                              # sigma_i ** 2
    weighted = losses * pl.reciprocal(2.0 * sig2)       # 0.5 * loss / sigma^2 (exact)
    reg = jnp.log(1.0 + sig2)                           # log(1 + sigma^2)
    out_ref[0] = jnp.sum(weighted + reg)                # scalar sum over tasks


def uncertainty_weight_loss(losses, sigmas):
    """Pallas equivalent of UncertaintyWeightLoss.forward.

    losses: sequence of scalar loss values (or 1-D array of shape (N,)).
    sigmas: 1-D array of shape (N,) (the learnable parameters, init = ones).
    Returns a scalar f32.
    """
    losses_arr = jnp.asarray(losses, dtype=jnp.float32).reshape(1, -1)
    sigmas_arr = jnp.asarray(sigmas, dtype=jnp.float32).reshape(1, -1)
    assert losses_arr.shape == sigmas_arr.shape
    n = losses_arr.shape[1]

    out = pl.pallas_call(
        _uncertainty_weight_kernel,
        out_shape=jax.ShapeDtypeStruct((1,), jnp.float32),
        in_specs=[
            pl.BlockSpec(memory_space=pltpu.MemorySpace.VMEM),
            pl.BlockSpec(memory_space=pltpu.MemorySpace.VMEM),
        ],
        out_specs=pl.BlockSpec(memory_space=pltpu.MemorySpace.SMEM),
        cost_estimate=pl.CostEstimate(
            flops=5 * n,            # mul, mul(2x), div, add, reduce-add
            transcendentals=n,      # only the log (exact reciprocal is a divide)
            bytes_accessed=2 * n * 4 + 4,
        ),
    )(losses_arr, sigmas_arr)
    return out[0]


if __name__ == "__main__":
    num_losses = 4

    # Deterministic parameter init, matching nn.Parameter(torch.ones(num_losses)).
    sigmas = jnp.ones((num_losses,), dtype=jnp.float32)

    # Deterministic example scalar losses (e.g. outputs of CTC / CE / MSE heads).
    key = jax.random.PRNGKey(0)
    losses = jax.random.uniform(
        key, (num_losses,), dtype=jnp.float32, minval=0.1, maxval=2.0
    )

    result = uncertainty_weight_loss(losses, sigmas)
    result = jax.block_until_ready(result)

    # Pure-JAX reference check of the exact forward semantics.
    ref = jnp.sum(0.5 / (sigmas ** 2) * losses + jnp.log(1.0 + sigmas ** 2))
    assert jnp.allclose(result, ref, rtol=1e-5, atol=1e-5), (result, ref)

    print("KERNEL_OK")
</pallas_src>

<mosaic_0001>
module attributes {stable_mosaic.version = 11 : i64} {
  func.func @_uncertainty_weight_kernel(%arg0: memref<1x4xf32, #tpu.memory_space<vmem>>, %arg1: memref<1x4xf32, #tpu.memory_space<vmem>>, %arg2: memref<1xf32, #tpu.memory_space<smem>>) attributes {dimension_semantics = [], scalar_prefetch = 0 : i64, scratch_operands = 0 : i64, tpu.core_type = #tpu.core_type<tc>} {
    %c0 = arith.constant 0 : index
    %c0_0 = arith.constant 0 : index
    %0 = vector.load %arg0[%c0, %c0_0] : memref<1x4xf32, #tpu.memory_space<vmem>>, vector<1x4xf32>
    %c0_1 = arith.constant 0 : index
    %c0_2 = arith.constant 0 : index
    %1 = vector.load %arg1[%c0_1, %c0_2] : memref<1x4xf32, #tpu.memory_space<vmem>>, vector<1x4xf32>
    %2 = arith.mulf %1, %1 : vector<1x4xf32>
    %cst = arith.constant 2.000000e+00 : f32
    %3 = vector.broadcast %cst : f32 to vector<1x4xf32>
    %4 = arith.mulf %3, %2 : vector<1x4xf32>
    %5 = tpu.reciprocal %4 : vector<1x4xf32> -> vector<1x4xf32>
    %6 = arith.mulf %0, %5 : vector<1x4xf32>
    %cst_3 = arith.constant 1.000000e+00 : f32
    %7 = vector.broadcast %cst_3 : f32 to vector<1x4xf32>
    %8 = arith.addf %7, %2 : vector<1x4xf32>
    %9 = math.log %8 : vector<1x4xf32>
    %10 = arith.addf %6, %9 : vector<1x4xf32>
    %11 = vector.shape_cast %10 : vector<1x4xf32> to vector<1x1x4xf32>
    %cst_4 = arith.constant dense<0.000000e+00> : vector<1xf32>
    %12 = vector.multi_reduction <add>, %11, %cst_4 [1, 2] : vector<1x1x4xf32> to vector<1xf32>
    %13 = vector.shape_cast %12 : vector<1xf32> to vector<1x1x1xf32>
    %14 = vector.extract %13[0, 0, 0] : f32 from vector<1x1x1xf32>
    %c0_5 = arith.constant 0 : index
    %15 = memref.load %arg2[%c0_5] : memref<1xf32, #tpu.memory_space<smem>>
    memref.store %14, %arg2[%c0_5] : memref<1xf32, #tpu.memory_space<smem>>
    return
  }
}

</mosaic_0001>

<llo_original>
// kernel: tpu_custom_call.1
$region0: #{tpu_custom_call.1}
  #allocation0 [shape = 'u32[]', space=smem, size = 0x4, offset = 0x4, fixed_abs, tag = 'smem constant byte address 0x4 - core index']
  #allocation1 [shape = 'u32[144,128]{1,0:T(1,128)}', space=vmem, size = 0x12000, scoped, tag = 'internal scratch']
  %s0 = inlined_call_operand.hbm [shape: f32[1,4], index: 0, kind: input, shape index: {}]
  %s1 = inlined_call_operand.vmem [shape: f32[1,4], index: 1, kind: input, shape index: {}]
  %s2 = inlined_call_operand.hbm [shape: f32[1], index: 2, kind: output, shape index: {}]
  %s3 = sld [smem:[#allocation0]]
  $region22: #{tpu_custom_call.1} parent=0
    _
  %s5 = ssub.s32 1, %s3
  %s6 = scalar_select 0, %s5, %s3
  $region1: #{tpu_custom_call.1} parent=0
    #allocation2 [shape = 'u8[512]{0}', space=vmem, size = 0x400, scoped, tag = 'input window, operand 0, single buffered']
    #allocation3 [shape = 's32[1]{0}', space=sflag, size = 0x4, scoped, tag = 'scoped memory for tpu_custom_call.1']
    #allocation4 [shape = 's32[1]{0}', space=sflag, size = 0x4, scoped, tag = 'scoped memory for tpu_custom_call.1']
    #allocation5 [shape = 'u8[512]{0}', space=smem, size = 0x200, scoped, tag = 'output window, operand 0, single buffered']
    %7 = vsyncpa [#allocation3], 0
    %8 = vsyncpa [#allocation4], 0
    // Predicated region
    $region2: #{tpu_custom_call.1} parent=1 // pred_check
      _
    $region3: #{tpu_custom_call.1} parent=1 // pred_check_branch
      %10 = sbr.rel (0) target = $region5
    $region4: #{tpu_custom_call.1} parent=1 // pred_region
      %s12 = ssub.s32 16, 16
      %13 = vsyncadd [#allocation3], %s12
      %s15 = sshll.u32 [#allocation2], 4
      %s16 = int_to_ptr.vmem [resolvable:$true] %s15
      %18 = dma.hbm_to_vmem [thread:$0]  %s0, 16, %s16, [#allocation3]
    $region5: #{tpu_custom_call.1} parent=1 // pred_fallthru
      _
    // Predicated region
    $region6: #{tpu_custom_call.1} parent=1 // pred_check
      _
    $region7: #{tpu_custom_call.1} parent=1 // pred_check_branch
      %20 = sbr.rel (0) target = $region9
    $region8: #{tpu_custom_call.1} parent=1 // pred_region
      _
    $region9: #{tpu_custom_call.1} parent=1 // pred_fallthru
      _
    // Predicated region
    $region10: #{tpu_custom_call.1} parent=1 // pred_check
      _
    $region11: #{tpu_custom_call.1} parent=1 // pred_check_branch
      %22 = sbr.rel (0) target = $region13
    $region12: #{tpu_custom_call.1} parent=1 // pred_region
      %23 = dma.done [#allocation3], 16
    $region13: #{tpu_custom_call.1} parent=1 // pred_fallthru
      _
    %v24 = vld [vmem:[#allocation2] sm:$0x1]
    %v25 = vld [vmem:[%s1] sm:$0x1]
    %v26 = vmul.f32 %v25, %v25
    %v27 = vmul.f32 %v26, 2.0
    %v28 = vrcp.pop %v27
    %v29 = vmul.f32 %v24, %v28
    %v30 = vadd.f32 %v26, 1.0
    %v31 = vlog2.pop %v30
    %v32 = vmul.f32 %v31, 0.6931472
    %v33 = vadd.f32 %v29, %v32
    %vm34 = vcmask 24576
    %v35 = vsel %vm34, %v33, 0.0
    %36 = vadd.xlane.f32.xlu0 %v35
    %v37 = vpop.xlane.xlu0 %36
    %v38 = vrot.slane %v37, 4
    %v39 = vadd.f32 %v37, %v38
    %v40 = vrot.slane %v39, 2
    %v41 = vadd.f32 %v39, %v40
    %v42 = vrot.slane %v41, 1
    %v43 = vadd.f32 %v41, %v42
    %s44 = vtos %v43
    %s45 = scalar_lea.smem [#allocation5], 0
    %46 = sst [smem:[%s45]] %s44
    // Predicated region
    $region14: #{tpu_custom_call.1} parent=1 // pred_check
      _
    $region15: #{tpu_custom_call.1} parent=1 // pred_check_branch
      %48 = sbr.rel (0) target = $region17
    $region16: #{tpu_custom_call.1} parent=1 // pred_region
      %s50 = ssub.s32 16, 16
      %51 = vsyncadd [#allocation4], %s50
      %54 = dma.smem_to_hbm [#allocation5], 16, %s2, [#allocation4]
    $region17: #{tpu_custom_call.1} parent=1 // pred_fallthru
      _
    // Predicated region
    $region18: #{tpu_custom_call.1} parent=1 // pred_check
      _
    $region19: #{tpu_custom_call.1} parent=1 // pred_check_branch
      %56 = sbr.rel (0) target = $region21
    $region20: #{tpu_custom_call.1} parent=1 // pred_region
      %57 = dma.done [#allocation4], 16
    $region21: #{tpu_custom_call.1} parent=1 // pred_fallthru
      _
    %58 = sfence
    %59 = vsyncpa [#allocation3], 1
    %60 = vsyncpa [#allocation4], 1

</llo_original>
